<compile_context>
chip_gen: v6e
topology: v6e:2x2x1
jax: 0.10.0
libtpu: 0.0.40
codegen_flags: <defaults>
</compile_context>

<pallas_src>
import functools

import jax
import jax.numpy as jnp
from jax import lax
from jax.experimental import pallas as pl
from jax.experimental.pallas import tpu as pltpu

LANES = 128
SUBLANES = 8
NUM_CORE_SPLITS = 2   # leading "parallel" grid axis (uses both TCs on v7x)


def _pow_static(x, alpha):
    """x ** alpha, x >= 1. Integer alpha -> VPU multiplies; else EUP exp/log."""
    if float(alpha).is_integer() and 0 <= int(alpha) <= 32:
        n = int(alpha)
        if n == 0:
            return jnp.ones_like(x)
        result = None
        base = x
        while n:
            if n & 1:
                result = base if result is None else result * base
            n >>= 1
            if n:
                base = base * base
        return result
    # General path: x >= 1 everywhere (masked elements give x == 1), so log
    # is safe. exp/log run on the EUP slot (free w.r.t. the VPU hot path).
    return jnp.exp(jnp.float32(alpha) * jnp.log(x))


def _ofl_kernel(alpha, n_elems, tile_rows, tiles_per_core,
                yp_ref, yt_ref, out_ref):
    c = pl.program_id(0)          # core-split index
    i = pl.program_id(1)          # row-tile index within this core's share

    # out_ref is the (8,128) f32 accumulator block for this core; it stays
    # resident in VMEM across the (sequential) inner axis.
    @pl.when(i == 0)
    def _():
        out_ref[...] = jnp.zeros_like(out_ref)

    # Intended (unclamped) tile index. The index_map clamps the DMA'd block
    # into range; the mask below zeroes any element whose intended flat index
    # is >= n_elems (covers lane padding, the partial last tile, and fully
    # out-of-range duplicate tiles on the second core).
    tile_idx = c * tiles_per_core + i
    row_off = tile_idx * tile_rows

    yp = yp_ref[...].astype(jnp.float32)
    yt = yt_ref[...].astype(jnp.float32)
    abs_err = jnp.abs(yt - yp)

    r = lax.broadcasted_iota(jnp.int32, abs_err.shape, 0)
    l = lax.broadcasted_iota(jnp.int32, abs_err.shape, 1)
    elem_idx = (row_off + r) * LANES + l
    abs_err = jnp.where(elem_idx < n_elems, abs_err, 0.0)

    weights = _pow_static(abs_err + 1.0, alpha)
    wl = weights * abs_err

    # Partial reduction over the row axis only (pure VPU adds of (8,128)
    # vregs); the cross-lane/sublane reduction happens once, outside.
    partial = jnp.sum(wl.reshape(tile_rows // SUBLANES, SUBLANES, LANES), axis=0)
    out_ref[...] += partial


def outlier_focused_loss(y_pred, y_true, alpha, *, tile_rows=1024):
    """Pallas implementation of OutlierFocusedLoss.forward -> scalar f32."""
    assert y_pred.shape == y_true.shape
    assert y_pred.dtype == y_true.dtype
    n_elems = y_pred.size
    itemsize = jnp.dtype(y_pred.dtype).itemsize
    # Sublane granularity for the input dtype (f32 -> 8, bf16 -> 16, i8 -> 32).
    sub = SUBLANES * max(1, 4 // itemsize)

    yp = jnp.ravel(y_pred)
    yt = jnp.ravel(y_true)

    # Lane-pad only when needed (<= 127 elems; a no-op for typical NCHW sizes),
    # and guarantee at least one full sublane tile of rows for tiny inputs.
    rows = pl.cdiv(n_elems, LANES)
    pad_elems = rows * LANES - n_elems
    if rows < sub:
        pad_elems += (sub - rows) * LANES
        rows = sub
    if pad_elems:
        yp = jnp.pad(yp, (0, pad_elems))
        yt = jnp.pad(yt, (0, pad_elems))
    yp = yp.reshape(rows, LANES)
    yt = yt.reshape(rows, LANES)

    # Tile rows: as large as requested, multiple of `sub`, never larger than
    # the array (partial last block + in-kernel mask handle the remainder).
    tr = min(tile_rows, rows)
    tr = max(sub, (tr // sub) * sub)

    n_tiles = pl.cdiv(rows, tr)
    tiles_per_core = pl.cdiv(n_tiles, NUM_CORE_SPLITS)
    last_tile = n_tiles - 1

    def in_map(c, i):
        # Clamp so the DMA never targets a fully out-of-range block; the
        # kernel masks such duplicate tiles to zero contribution.
        return (jnp.minimum(c * tiles_per_core + i, last_tile), 0)

    kernel = functools.partial(_ofl_kernel, float(alpha), int(n_elems),
                               int(tr), int(tiles_per_core))

    is_int_alpha = float(alpha).is_integer() and 0 <= int(alpha) <= 32
    cost = pl.CostEstimate(
        flops=8 * n_elems,
        transcendentals=0 if is_int_alpha else 2 * n_elems,
        bytes_accessed=2 * n_elems * itemsize,
    )

    partials = pl.pallas_call(
        kernel,
        out_shape=jax.ShapeDtypeStruct(
            (NUM_CORE_SPLITS * SUBLANES, LANES), jnp.float32),
        grid_spec=pltpu.PrefetchScalarGridSpec(
            num_scalar_prefetch=0,
            grid=(NUM_CORE_SPLITS, tiles_per_core),
            in_specs=[
                pl.BlockSpec((tr, LANES), in_map),
                pl.BlockSpec((tr, LANES), in_map),
            ],
            out_specs=pl.BlockSpec((SUBLANES, LANES), lambda c, i: (c, 0)),
        ),
        compiler_params=pltpu.CompilerParams(
            dimension_semantics=("parallel", "arbitrary"),
        ),
        cost_estimate=cost,
    )(yp, yt)

    # Tiny final cross-lane reduction (2*8*128 elems) + mean normalisation.
    return jnp.sum(partials) / jnp.float32(n_elems)


def outlier_focused_loss_ref(y_pred, y_true, alpha):
    err = y_true.astype(jnp.float32) - y_pred.astype(jnp.float32)
    base = jnp.abs(err)
    w = (base + 1.0) ** alpha
    return jnp.mean(w * base)


if __name__ == "__main__":
    key = jax.random.PRNGKey(0)
    k1, k2, k3, k4 = jax.random.split(key, 4)

    # Case 1: lane-aligned NCHW input, integer alpha (pure-VPU weight path).
    y_pred = jax.random.normal(k1, (2, 4, 16, 16), dtype=jnp.float32)
    y_true = jax.random.normal(k2, (2, 4, 16, 16), dtype=jnp.float32)
    out = jax.block_until_ready(outlier_focused_loss(y_pred, y_true, 2.0))
    ref = outlier_focused_loss_ref(y_pred, y_true, 2.0)
    assert jnp.allclose(out, ref, rtol=1e-5, atol=1e-5), (out, ref)

    # Case 2: non-128-multiple size + fractional alpha (EUP path) to exercise
    # the in-kernel masking of lane padding / partial tiles.
    y_pred2 = jax.random.normal(k3, (3, 5, 7, 11), dtype=jnp.float32)
    y_true2 = jax.random.normal(k4, (3, 5, 7, 11), dtype=jnp.float32)
    out2 = jax.block_until_ready(outlier_focused_loss(y_pred2, y_true2, 1.7))
    ref2 = outlier_focused_loss_ref(y_pred2, y_true2, 1.7)
    assert jnp.allclose(out2, ref2, rtol=1e-5, atol=1e-5), (out2, ref2)

    print("KERNEL_OK")
</pallas_src>

<mosaic_0001>
module attributes {stable_mosaic.version = 11 : i64} {
  func.func @_ofl_kernel(%arg0: i32, %arg1: i32, %arg2: memref<16x128xf32, #tpu.memory_space<vmem>>, %arg3: memref<16x128xf32, #tpu.memory_space<vmem>>, %arg4: memref<8x128xf32, #tpu.memory_space<vmem>>) attributes {dimension_semantics = [#tpu.dimension_semantics<parallel>, #tpu.dimension_semantics<arbitrary>], iteration_bounds = array<i64: 2, 1>, scalar_prefetch = 0 : i64, scratch_operands = 0 : i64, tpu.core_type = #tpu.core_type<tc>, window_params = [{transform_indices = @transform_0, window_bounds = array<i64: 16, 128>}, {transform_indices = @transform_1, window_bounds = array<i64: 16, 128>}, {transform_indices = @transform_2, window_bounds = array<i64: 8, 128>}]} {
    %c0_i32 = arith.constant 0 : i32
    %0 = arith.cmpi eq, %arg1, %c0_i32 : i32
    %1 = arith.extui %0 : i1 to i32
    %c0_i32_0 = arith.constant 0 : i32
    %2 = arith.cmpi ne, %1, %c0_i32_0 : i32
    scf.if %2 {
      %cst_10 = arith.constant 0.000000e+00 : f32
      %30 = vector.broadcast %cst_10 : f32 to vector<8x128xf32>
      %c0_11 = arith.constant 0 : index
      %c0_12 = arith.constant 0 : index
      %31 = vector.load %arg4[%c0_11, %c0_12] : memref<8x128xf32, #tpu.memory_space<vmem>>, vector<8x128xf32>
      tpu.vector_store %arg4[%c0_11, %c0_12], %30 {strides = array<i32>} : memref<8x128xf32, #tpu.memory_space<vmem>>, vector<8x128xf32>,
    } else {
    }
    %c1_i32 = arith.constant 1 : i32
    %3 = arith.muli %arg0, %c1_i32 : i32
    %4 = arith.addi %3, %arg1 : i32
    %c16_i32 = arith.constant 16 : i32
    %5 = arith.muli %4, %c16_i32 : i32
    %c0 = arith.constant 0 : index
    %c0_1 = arith.constant 0 : index
    %6 = vector.load %arg2[%c0, %c0_1] : memref<16x128xf32, #tpu.memory_space<vmem>>, vector<16x128xf32>
    %c0_2 = arith.constant 0 : index
    %c0_3 = arith.constant 0 : index
    %7 = vector.load %arg3[%c0_2, %c0_3] : memref<16x128xf32, #tpu.memory_space<vmem>>, vector<16x128xf32>
    %8 = arith.subf %7, %6 : vector<16x128xf32>
    %9 = math.absf %8 : vector<16x128xf32>
    %10 = tpu.iota {dimensions = array<i32: 0>} : vector<16x128xi32>
    %11 = tpu.iota {dimensions = array<i32: 1>} : vector<16x128xi32>
    %12 = vector.broadcast %5 : i32 to vector<16x128xi32>
    %13 = arith.addi %12, %10 : vector<16x128xi32>
    %c128_i32 = arith.constant 128 : i32
    %14 = vector.broadcast %c128_i32 : i32 to vector<16x128xi32>
    %15 = arith.muli %13, %14 : vector<16x128xi32>
    %16 = arith.addi %15, %11 : vector<16x128xi32>
    %c2048_i32 = arith.constant 2048 : i32
    %17 = vector.broadcast %c2048_i32 : i32 to vector<16x128xi32>
    %18 = arith.cmpi slt, %16, %17 : vector<16x128xi32>
    %cst = arith.constant 0.000000e+00 : f32
    %19 = vector.broadcast %cst : f32 to vector<16x128xf32>
    %20 = arith.select %18, %9, %19 : vector<16x128xi1>, vector<16x128xf32>
    %cst_4 = arith.constant 1.000000e+00 : f32
    %21 = vector.broadcast %cst_4 : f32 to vector<16x128xf32>
    %22 = arith.addf %20, %21 : vector<16x128xf32>
    %23 = arith.mulf %22, %22 : vector<16x128xf32>
    %24 = arith.mulf %23, %20 : vector<16x128xf32>
    %25 = vector.shape_cast %24 : vector<16x128xf32> to vector<2x8x128xf32>
    %cst_5 = arith.constant dense<0.000000e+00> : vector<8x128xf32>
    %26 = vector.multi_reduction <add>, %25, %cst_5 [0] : vector<2x8x128xf32> to vector<8x128xf32>
    %c0_6 = arith.constant 0 : index
    %c0_7 = arith.constant 0 : index
    %27 = vector.load %arg4[%c0_6, %c0_7] : memref<8x128xf32, #tpu.memory_space<vmem>>, vector<8x128xf32>
    %28 = arith.addf %27, %26 : vector<8x128xf32>
    %c0_8 = arith.constant 0 : index
    %c0_9 = arith.constant 0 : index
    %29 = vector.load %arg4[%c0_8, %c0_9] : memref<8x128xf32, #tpu.memory_space<vmem>>, vector<8x128xf32>
    tpu.vector_store %arg4[%c0_8, %c0_9], %28 {strides = array<i32>} : memref<8x128xf32, #tpu.memory_space<vmem>>, vector<8x128xf32>,
    return
  }
  func.func @transform_0(%arg0: i32, %arg1: i32) -> (i32, i32) {
    %c1_i32 = arith.constant 1 : i32
    %0 = arith.muli %arg0, %c1_i32 : i32
    %1 = arith.addi %0, %arg1 : i32
    %c0_i32 = arith.constant 0 : i32
    %2 = arith.minsi %1, %c0_i32 : i32
    %c0_i32_0 = arith.constant 0 : i32
    %c0_i32_1 = arith.constant 0 : i32
    return %2, %c0_i32_0 : i32, i32
  }
  func.func @transform_1(%arg0: i32, %arg1: i32) -> (i32, i32) {
    %c1_i32 = arith.constant 1 : i32
    %0 = arith.muli %arg0, %c1_i32 : i32
    %1 = arith.addi %0, %arg1 : i32
    %c0_i32 = arith.constant 0 : i32
    %2 = arith.minsi %1, %c0_i32 : i32
    %c0_i32_0 = arith.constant 0 : i32
    %c0_i32_1 = arith.constant 0 : i32
    return %2, %c0_i32_0 : i32, i32
  }
  func.func @transform_2(%arg0: i32, %arg1: i32) -> (i32, i32) {
    %c0_i32 = arith.constant 0 : i32
    %c0_i32_0 = arith.constant 0 : i32
    return %arg0, %c0_i32 : i32, i32
  }
}

</mosaic_0001>

<llo_original>
// kernel: tpu_custom_call.1
$region0: #{tpu_custom_call.1}
  #allocation0 [shape = 'u32[]', space=smem, size = 0x4, offset = 0x4, fixed_abs, tag = 'smem constant byte address 0x4 - core index']
  #allocation1 [shape = 'u32[144,128]{1,0:T(1,128)}', space=vmem, size = 0x12000, scoped, tag = 'internal scratch']
  %s0 = inlined_call_operand.hbm [shape: f32[16,128], index: 0, kind: input, shape index: {}]
  %s1 = inlined_call_operand.hbm [shape: f32[16,128], index: 1, kind: input, shape index: {}]
  %s2 = inlined_call_operand.hbm [shape: f32[16,128], index: 2, kind: output, shape index: {}]
  %s3 = sld [smem:[#allocation0]]
  $region53: #{tpu_custom_call.1} parent=0
    _
  %s5 = ssub.s32 1, %s3
  %s6 = scalar_select 0, %s5, %s3
  $region1: #{tpu_custom_call.1} parent=0
    #allocation2 [shape = 'u8[16384]{0}', space=vmem, size = 0x4000, scoped, tag = 'input window, operand 0']
    #allocation3 [shape = 's32[2]{0}', space=sflag, size = 0x8, scoped, tag = 'scoped memory for tpu_custom_call.1']
    #allocation4 [shape = 's32[2]{0}', space=sflag, size = 0x8, scoped, tag = 'scoped memory for tpu_custom_call.1']
    #allocation5 [shape = 'u8[16384]{0}', space=vmem, size = 0x4000, scoped, tag = 'input window, operand 1']
    #allocation6 [shape = 's32[2]{0}', space=sflag, size = 0x8, scoped, tag = 'scoped memory for tpu_custom_call.1']
    #allocation7 [shape = 'u8[8192]{0}', space=vmem, size = 0x2000, scoped, tag = 'output window, operand 0']
    %7 = vsyncpa [#allocation3], 0
    %s8 = scalar_lea.sflag [#allocation3], 1
    %9 = vsyncpa %s8, 0
    %10 = vsyncpa [#allocation6], 0
    %s11 = scalar_lea.sflag [#allocation6], 1
    %12 = vsyncpa %s11, 0
    %13 = vsyncpa [#allocation4], 0
    %s14 = scalar_lea.sflag [#allocation4], 1
    %15 = vsyncpa %s14, 0
    loop: start=0, step=1, limit=4
    $region2: #{tpu_custom_call.1} parent=1 // loop_pre_header
      _
    $region3: #{tpu_custom_call.1} parent=1 // loop_header
      %s17 = sphi 0, %s21
      %p18 = scmp.ge.s32.totalorder %s17, 4
      %s24 = sphi 0, %s36
      %s25 = sphi 0, %s32
      %s26 = sphi 0, %s24
      %s27 = sphi 0, %s25
      %s28 = sphi 0, %s26
      %s29 = sphi 0, %s27
      %s45 = sphi 0, %s47
      %s48 = sphi 0, %s45
      %s49 = sphi 0, %s48
      %s65 = sphi 0, %s49
      %s77 = sphi 0, %s79
      %s80 = sphi 0, %s77
      %s81 = sphi 0, %s80
      %s97 = sphi 0, %s81
      %s103 = sphi 0, %s105
      %s106 = sphi 0, %s103
      %s107 = sphi 0, %s106
      %s123 = sphi 0, %s107
    $region4: #{tpu_custom_call.1} parent=1 // loop_header_branch
      %20 = sbr.rel (%p18) target = $region8
    $region5: #{tpu_custom_call.1} parent=1 // loop_body
      %s22 = ssub.s32 %s17, 1
      %s23 = ssub.s32 %s17, 2
      %s30 = sadd.s32 1, %s25
      %p31 = scmp.ge.s32.totalorder %s30, 1
      %s32 = scalar_select %p31, 0, %s30
      %s33 = sadd.s32 1, %s24
      %s34 = scalar_select %p31, %s33, %s24
      %p35 = scmp.ge.s32.totalorder %s34, 2
      %s36 = scalar_select %p35, 0, %s34
      %s37 = sadd.s32 %s24, %s25
      %p38 = scmp.lt.s32.totalorder %s37, 0
      %s39 = scalar_select %p38, %s37, 0
      %s40 = sadd.s32 %s36, %s32
      %p41 = scmp.lt.s32.totalorder %s40, 0
      %s42 = scalar_select %p41, %s40, 0
      %s43 = ssub.s32 %s39, %s42
      %p44 = scmp.eq.s32.totalorder %s43, 0
      %s46 = sadd.s32 %s45, 1
      %s47 = scalar_select %p44, %s45, %s46
      %p50 = pneg %p44
      %p51 = scmp.eq.s32.totalorder %s17, 1
      %p52 = por %p50, %p51
      %p53 = scmp.ne.s32.totalorder %s45, %s48
      %p54 = scmp.eq.s32.totalorder %s17, 0
      %p55 = por %p53, %p54
      %p56 = scmp.ne.s32.totalorder %s45, %s48
      %p57 = scmp.eq.s32.totalorder %s22, 1
      %p58 = por %p56, %p57
      %p59 = scmp.ne.s32.totalorder %s48, %s49
      %p60 = scmp.eq.s32.totalorder %s22, 0
      %p61 = por %p59, %p60
      %p62 = scmp.ne.s32.totalorder %s48, %s49
      %p63 = scmp.eq.s32.totalorder %s23, 1
      %p64 = por %p62, %p63
      %p66 = scmp.ne.s32.totalorder %s49, %s65
      %p67 = scmp.eq.s32.totalorder %s23, 0
      %p68 = por %p66, %p67
      %s69 = sadd.s32 %s24, %s25
      %p70 = scmp.lt.s32.totalorder %s69, 0
      %s71 = scalar_select %p70, %s69, 0
      %s72 = sadd.s32 %s36, %s32
      %p73 = scmp.lt.s32.totalorder %s72, 0
      %s74 = scalar_select %p73, %s72, 0
      %s75 = ssub.s32 %s71, %s74
      %p76 = scmp.eq.s32.totalorder %s75, 0
      %s78 = sadd.s32 %s77, 1
      %s79 = scalar_select %p76, %s77, %s78
      %p82 = pneg %p76
      %p83 = scmp.eq.s32.totalorder %s17, 1
      %p84 = por %p82, %p83
      %p85 = scmp.ne.s32.totalorder %s77, %s80
      %p86 = scmp.eq.s32.totalorder %s17, 0
      %p87 = por %p85, %p86
      %p88 = scmp.ne.s32.totalorder %s77, %s80
      %p89 = scmp.eq.s32.totalorder %s22, 1
      %p90 = por %p88, %p89
      %p91 = scmp.ne.s32.totalorder %s80, %s81
      %p92 = scmp.eq.s32.totalorder %s22, 0
      %p93 = por %p91, %p92
      %p94 = scmp.ne.s32.totalorder %s80, %s81
      %p95 = scmp.eq.s32.totalorder %s23, 1
      %p96 = por %p94, %p95
      %p98 = scmp.ne.s32.totalorder %s81, %s97
      %p99 = scmp.eq.s32.totalorder %s23, 0
      %p100 = por %p98, %p99
      %s101 = ssub.s32 %s24, %s36
      %p102 = scmp.eq.s32.totalorder %s101, 0
      %s104 = sadd.s32 %s103, 1
      %s105 = scalar_select %p102, %s103, %s104
      %p108 = pneg %p102
      %p109 = scmp.eq.s32.totalorder %s17, 1
      %p110 = por %p108, %p109
      %p111 = scmp.ne.s32.totalorder %s103, %s106
      %p112 = scmp.eq.s32.totalorder %s17, 0
      %p113 = por %p111, %p112
      %p114 = scmp.ne.s32.totalorder %s103, %s106
      %p115 = scmp.eq.s32.totalorder %s22, 1
      %p116 = por %p114, %p115
      %p117 = scmp.ne.s32.totalorder %s106, %s107
      %p118 = scmp.eq.s32.totalorder %s22, 0
      %p119 = por %p117, %p118
      %p120 = scmp.ne.s32.totalorder %s106, %s107
      %p121 = scmp.eq.s32.totalorder %s23, 1
      %p122 = por %p120, %p121
      %p124 = scmp.ne.s32.totalorder %s107, %s123
      %p125 = scmp.eq.s32.totalorder %s23, 0
      %p126 = por %p124, %p125
      %p127 = scmp.le.s32.totalorder 1, %s17
      %p128 = scmp.lt.s32.totalorder %s17, 3
      %p129 = pnand %p127, %p128
      %p130 = pneg %p129
      // Predicated region
      $region9: #{tpu_custom_call.1} parent=5 // pred_check
        _
      $region10: #{tpu_custom_call.1} parent=5 // pred_check_branch
        %132 = sbr.rel (%p129) target = $region12
      $region11: #{tpu_custom_call.1} parent=5 // pred_region
        %s133 = ssub.s32 %s17, 1
      $region12: #{tpu_custom_call.1} parent=5 // pred_fallthru
        _
      %p134 = scmp.lt.s32.totalorder %s17, 2
      // Predicated region
      $region13: #{tpu_custom_call.1} parent=5 // pred_check
        %p135 = pneg %p134
      $region14: #{tpu_custom_call.1} parent=5 // pred_check_branch
        %137 = sbr.rel (%p135) target = $region16
      $region15: #{tpu_custom_call.1} parent=5 // pred_region
        // Predicated region
        $region17: #{tpu_custom_call.1} parent=15 // pred_check
          %p138 = pneg %p55
        $region18: #{tpu_custom_call.1} parent=15 // pred_check_branch
          %140 = sbr.rel (%p138) target = $region20
        $region19: #{tpu_custom_call.1} parent=15 // pred_region
          %s141 = sand.u32 %s45, 1
          %s142 = scalar_lea.sflag [#allocation3], %s141
          %s143 = sand.u32 %s45, 1
          %s144 = smul.addr %s143, 16
          %s145 = scalar_lea.vmem [#allocation2], %s144
          %s146 = sadd.s32 %s24, %s25
          %p147 = scmp.lt.s32.totalorder %s146, 0
          %s148 = scalar_select %p147, %s146, 0
          %s149 = smul.u32 2, %s148
          %s151 = ssub.s32 256, 256
          %152 = vsyncadd %s142, %s151
          %s153 = smul.addr %s149, 128
          %s154 = scalar_lea.hbm %s0, %s153
          %s155 = sshll.u32 %s145, 4
          %s156 = int_to_ptr.vmem [resolvable:$true] %s155
          %161 = dma.hbm_to_vmem [thread:$0]  %s154, 256, %s156, %s142, 128, 128, 8
        $region20: #{tpu_custom_call.1} parent=15 // pred_fallthru
          _
        // Predicated region
        $region21: #{tpu_custom_call.1} parent=15 // pred_check
          %p162 = pneg %p87
        $region22: #{tpu_custom_call.1} parent=15 // pred_check_branch
          %164 = sbr.rel (%p162) target = $region24
        $region23: #{tpu_custom_call.1} parent=15 // pred_region
          %s165 = sand.u32 %s77, 1
          %s166 = scalar_lea.sflag [#allocation6], %s165
          %s167 = sand.u32 %s77, 1
          %s168 = smul.addr %s167, 16
          %s169 = scalar_lea.vmem [#allocation5], %s168
          %s170 = sadd.s32 %s24, %s25
          %p171 = scmp.lt.s32.totalorder %s170, 0
          %s172 = scalar_select %p171, %s170, 0
          %s173 = smul.u32 2, %s172
          %s175 = ssub.s32 256, 256
          %176 = vsyncadd %s166, %s175
          %s177 = smul.addr %s173, 128
          %s178 = scalar_lea.hbm %s1, %s177
          %s179 = sshll.u32 %s169, 4
          %s180 = int_to_ptr.vmem [resolvable:$true] %s179
          %185 = dma.hbm_to_vmem [thread:$0]  %s178, 256, %s180, %s166, 128, 128, 8
        $region24: #{tpu_custom_call.1} parent=15 // pred_fallthru
          _
      $region16: #{tpu_custom_call.1} parent=5 // pred_fallthru
        _
      %p186 = scmp.le.s32.totalorder 1, %s17
      %p187 = scmp.lt.s32.totalorder %s17, 3
      %p188 = pnand %p186, %p187
      %p189 = pneg %p188
      // Predicated region
      $region25: #{tpu_custom_call.1} parent=5 // pred_check
        _
      $region26: #{tpu_custom_call.1} parent=5 // pred_check_branch
        %191 = sbr.rel (%p188) target = $region28
      $region27: #{tpu_custom_call.1} parent=5 // pred_region
        %s192 = ssub.s32 %s17, 1
        %s193 = sand.u32 %s48, 1
        %s194 = scalar_lea.sflag [#allocation3], %s193
        %s195 = sand.u32 %s48, 1
        %s196 = smul.addr %s195, 16
        %s197 = scalar_lea.vmem [#allocation2], %s196
        // Predicated region
        $region29: #{tpu_custom_call.1} parent=27 // pred_check
          %p198 = pneg %p61
        $region30: #{tpu_custom_call.1} parent=27 // pred_check_branch
          %200 = sbr.rel (%p198) target = $region32
        $region31: #{tpu_custom_call.1} parent=27 // pred_region
          %201 = dma.done %s194, 256
        $region32: #{tpu_custom_call.1} parent=27 // pred_fallthru
          _
        %s202 = sand.u32 %s80, 1
        %s203 = scalar_lea.sflag [#allocation6], %s202
        %s204 = sand.u32 %s80, 1
        %s205 = smul.addr %s204, 16
        %s206 = scalar_lea.vmem [#allocation5], %s205
        // Predicated region
        $region33: #{tpu_custom_call.1} parent=27 // pred_check
          %p207 = pneg %p93
        $region34: #{tpu_custom_call.1} parent=27 // pred_check_branch
          %209 = sbr.rel (%p207) target = $region36
        $region35: #{tpu_custom_call.1} parent=27 // pred_region
          %210 = dma.done %s203, 256
        $region36: #{tpu_custom_call.1} parent=27 // pred_fallthru
          _
        %s211 = sand.u32 %s48, 1
        %s212 = scalar_lea.sflag [#allocation3], %s211
        %s213 = sand.u32 %s48, 1
        %s214 = smul.addr %s213, 16
        %s215 = scalar_lea.vmem [#allocation2], %s214
        %p216 = pneg %p61
        %p217 = pneg %p58
        %s218 = sand.u32 %s80, 1
        %s219 = scalar_lea.sflag [#allocation6], %s218
        %s220 = sand.u32 %s80, 1
        %s221 = smul.addr %s220, 16
        %s222 = scalar_lea.vmem [#allocation5], %s221
        %p223 = pneg %p93
        %p224 = pneg %p90
        %p225 = pneg %p119
        %p226 = pneg %p116
        %s227 = sand.u32 %s106, 1
        %s228 = scalar_lea.sflag [#allocation4], %s227
        %s229 = sand.u32 %s106, 1
        %s230 = smul.addr %s229, 8
        %s231 = scalar_lea.vmem [#allocation7], %s230
        %s232 = sadd.s32 %s26, %s27
        %p233 = scmp.lt.s32.totalorder %s232, 0
        %s234 = scalar_select %p233, %s232, 0
        %s235 = smul.u32 2, %s234
        %s236 = sadd.s32 %s26, %s27
        %p237 = scmp.lt.s32.totalorder %s236, 0
        %s238 = scalar_select %p237, %s236, 0
        %s239 = smul.u32 2, %s238
        %p240 = scmp.eq.s32.totalorder %s27, 0
        // Predicated region
        $region37: #{tpu_custom_call.1} parent=27 // pred_check
          %p241 = pneg %p240
        $region38: #{tpu_custom_call.1} parent=27 // pred_check_branch
          %243 = sbr.rel (%p241) target = $region40
        $region39: #{tpu_custom_call.1} parent=27 // pred_region
          %244 = vst [vmem:[%s231] sm:$0xff] 0.0
        $region40: #{tpu_custom_call.1} parent=27 // pred_fallthru
          _
        %s245 = sadd.s32 %s26, %s27
        %s246 = smul.u32 %s245, 16
        %v247 = vld [vmem:[%s197] sm:$0xff]
        %v248 = vld [vmem:[%s197 + $0x8] sm:$0xff]
        %v249 = vld [vmem:[%s206] sm:$0xff]
        %v250 = vld [vmem:[%s206 + $0x8] sm:$0xff]
        %v251 = vsub.f32 %v249, %v247
        %v252 = vsub.f32 %v250, %v248
        %v253 = vand.u32 2147483647, %v251
        %v254 = vand.u32 2147483647, %v252
        %v255 = vlaneseq
        %v256 = vshrl.u32 %v255, 7
        %v257 = vadd.s32 %v256, 8
        %v258 = vlaneseq
        %v259 = vand.u32 %v258, 127
        %v260 = vstv %s246
        %v261 = vadd.s32 %v260, %v256
        %v262 = vadd.s32 %v260, %v257
        %v263 = vmul.u32 %v261, 128
        %v264 = vmul.u32 %v262, 128
        %v265 = vadd.s32 %v263, %v259
        %v266 = vadd.s32 %v264, %v259
        %vm267 = vcmp.lt.s32.totalorder %v265, 2048
        %vm268 = vcmp.lt.s32.totalorder %v266, 2048
        %v269 = vsel %vm267, %v253, 0.0
        %v270 = vsel %vm268, %v254, 0.0
        %v271 = vadd.f32 %v269, 1.0
        %v272 = vadd.f32 %v270, 1.0
        %v273 = vmul.f32 %v271, %v271
        %v274 = vmul.f32 %v272, %v272
        %v275 = vmul.f32 %v273, %v269
        %v276 = vmul.f32 %v274, %v270
        %v277 = vadd.f32 %v275, %v276
        %v278 = vld [vmem:[%s231] sm:$0xff]
        %v279 = vadd.f32 %v278, %v277
        %280 = vst [vmem:[%s231] sm:$0xff] %v279
        %s281 = sand.u32 %s106, 1
        %s282 = scalar_lea.sflag [#allocation4], %s281
        %s283 = sand.u32 %s106, 1
        %s284 = smul.addr %s283, 8
        %s285 = scalar_lea.vmem [#allocation7], %s284
        // Predicated region
        $region41: #{tpu_custom_call.1} parent=27 // pred_check
          %p286 = pneg %p116
        $region42: #{tpu_custom_call.1} parent=27 // pred_check_branch
          %288 = sbr.rel (%p286) target = $region44
        $region43: #{tpu_custom_call.1} parent=27 // pred_region
          %s290 = ssub.s32 128, 128
          %291 = vsyncadd %s282, %s290
          %s292 = smul.addr %s26, 128
          %s293 = scalar_lea.hbm %s2, %s292
          %s295 = sshll.u32 %s285, 4
          %s296 = int_to_ptr.vmem [resolvable:$true] %s295
          %298 = dma.vmem_to_hbm [thread:$0]  %s296, 128, %s293, %s282
        $region44: #{tpu_custom_call.1} parent=27 // pred_fallthru
          _
      $region28: #{tpu_custom_call.1} parent=5 // pred_fallthru
        _
      %p299 = scmp.le.s32.totalorder 2, %s17
      // Predicated region
      $region45: #{tpu_custom_call.1} parent=5 // pred_check
        %p300 = pneg %p299
      $region46: #{tpu_custom_call.1} parent=5 // pred_check_branch
        %302 = sbr.rel (%p300) target = $region48
      $region47: #{tpu_custom_call.1} parent=5 // pred_region
        %s303 = ssub.s32 %s17, 2
        // Predicated region
        $region49: #{tpu_custom_call.1} parent=47 // pred_check
          %p304 = pneg %p122
        $region50: #{tpu_custom_call.1} parent=47 // pred_check_branch
          %306 = sbr.rel (%p304) target = $region52
        $region51: #{tpu_custom_call.1} parent=47 // pred_region
          %s307 = sand.u32 %s107, 1
          %s308 = scalar_lea.sflag [#allocation4], %s307
          %s309 = sand.u32 %s107, 1
          %s310 = smul.addr %s309, 8
          %s311 = scalar_lea.vmem [#allocation7], %s310
          %312 = dma.done %s308, 128
        $region52: #{tpu_custom_call.1} parent=47 // pred_fallthru
          _
      $region48: #{tpu_custom_call.1} parent=5 // pred_fallthru
        _
    $region6: #{tpu_custom_call.1} parent=1 // loop_footer
      %s21 = sadd.s32 1, %s17
    $region7: #{tpu_custom_call.1} parent=1 // loop_footer_branch
      %16 = sbr.rel target = $region3
    $region8: #{tpu_custom_call.1} parent=1 // loop_exit
      _
    %313 = vsyncpa [#allocation3], 1
    %s314 = scalar_lea.sflag [#allocation3], 1
    %315 = vsyncpa %s314, 1
    %316 = vsyncpa [#allocation6], 1
    %s317 = scalar_lea.sflag [#allocation6], 1
    %318 = vsyncpa %s317, 1
    %319 = vsyncpa [#allocation4], 1
    %s320 = scalar_lea.sflag [#allocation4], 1
    %321 = vsyncpa %s320, 1

</llo_original>
